<compile_context>
chip_gen: v7x
topology: tpu7x:2x2x1
jax: 0.10.0
libtpu: 0.0.40
codegen_flags: <defaults>
</compile_context>

<pallas_src>
import functools

import jax
import jax.numpy as jnp
from jax.experimental import pallas as pl
from jax.experimental.pallas import tpu as pltpu

D_IN, H1, H2, D_OUT = 28 * 28, 50, 25, 10
H_PAD = 128  # 50 / 25 / 10 all padded to one vreg lane width (zeros -> math unchanged)


def _round_up(n, m):
    return (n + m - 1) // m * m


def mlp_kernel(x_ref, w1_ref, w2_ref, w3_ref, b_ref, o_ref):
    # x_ref: (TB, 784) f32; w*_ref: bf16 (resident); b_ref: (8, 128) f32 (rows 0..2 = b1,b2,b3)
    x = x_ref[...].astype(jnp.bfloat16)  # cast on the (idle) VPU; HBM stream stays native
    b1 = b_ref[0:1, :]
    b2 = b_ref[1:2, :]
    b3 = b_ref[2:3, :]
    # Layer 1: bf16 MXU matmul over K=784, f32 accumulate; bias + ReLU in f32.
    h1 = jnp.dot(x, w1_ref[...], preferred_element_type=jnp.float32)
    h1 = jnp.maximum(h1 + b1, 0.0).astype(jnp.bfloat16)
    # Layer 2
    h2 = jnp.dot(h1, w2_ref[...], preferred_element_type=jnp.float32)
    h2 = jnp.maximum(h2 + b2, 0.0).astype(jnp.bfloat16)
    # Layer 3 (logits) -> lane-dense 128-wide f32 output block (sliced to 10 outside).
    o_ref[...] = (
        jnp.dot(h2, w3_ref[...], preferred_element_type=jnp.float32) + b3
    ).astype(o_ref.dtype)


def pack_params(params):
    """Pad out-dims to 128 lanes, cast weights to bf16, pack biases into one slab."""
    w1, b1, w2, b2, w3, b3 = params
    w1p = jnp.zeros((D_IN, H_PAD), jnp.float32).at[:, :H1].set(w1)   # K stays 784
    w2p = jnp.zeros((H_PAD, H_PAD), jnp.float32).at[:H1, :H2].set(w2)
    w3p = jnp.zeros((H_PAD, H_PAD), jnp.float32).at[:H2, :D_OUT].set(w3)
    bias = jnp.zeros((8, H_PAD), jnp.float32)
    bias = bias.at[0, :H1].set(b1[0])
    bias = bias.at[1, :H2].set(b2[0])
    bias = bias.at[2, :D_OUT].set(b3[0])
    return (
        w1p.astype(jnp.bfloat16),
        w2p.astype(jnp.bfloat16),
        w3p.astype(jnp.bfloat16),
        bias,
    )


@functools.partial(jax.jit, static_argnames=("tb",))
def mlp_forward(x, packed_params, tb=1024):
    w1p, w2p, w3p, bias = packed_params
    B = x.shape[0]

    # Batch tile: multiple of 8, <= tb, and capped so the grid has >= 2 steps when the
    # batch allows (so "parallel" batch dim can use both TensorCores on v7x).
    tb_cap = max(8, _round_up(pl.cdiv(B, 2), 8))
    TB = _round_up(min(tb, tb_cap), 8)
    grid = (pl.cdiv(B, TB),)  # ragged last block handled by Pallas (masked writes)

    cost = pl.CostEstimate(
        flops=2 * B * (D_IN * H_PAD + 2 * H_PAD * H_PAD),
        transcendentals=0,
        bytes_accessed=(
            x.size * 4
            + (w1p.size + w2p.size + w3p.size) * 2
            + bias.size * 4
            + B * H_PAD * 4
        ),
    )

    out = pl.pallas_call(
        mlp_kernel,
        out_shape=jax.ShapeDtypeStruct((B, H_PAD), jnp.float32),
        grid=grid,
        in_specs=[
            pl.BlockSpec((TB, D_IN), lambda i: (i, 0)),     # x: streamed per batch tile (native f32)
            pl.BlockSpec((D_IN, H_PAD), lambda i: (0, 0)),  # weights: resident in VMEM
            pl.BlockSpec((H_PAD, H_PAD), lambda i: (0, 0)),
            pl.BlockSpec((H_PAD, H_PAD), lambda i: (0, 0)),
            pl.BlockSpec((8, H_PAD), lambda i: (0, 0)),     # packed biases
        ],
        out_specs=pl.BlockSpec((TB, H_PAD), lambda i: (i, 0)),
        compiler_params=pltpu.CompilerParams(
            dimension_semantics=("parallel",),
            vmem_limit_bytes=32 * 1024 * 1024,  # headroom on v5e for big TB; safe on v6e/v7x
        ),
        cost_estimate=cost,
    )(x, w1p, w2p, w3p, bias)

    return out[:, :D_OUT]


def xavier_uniform(key, fan_in, fan_out):
    bound = jnp.sqrt(6.0 / (fan_in + fan_out))
    return jax.random.uniform(
        key, (fan_in, fan_out), dtype=jnp.float32, minval=-bound, maxval=bound
    )


def linear_bias(key, fan_in, fan_out):
    # PyTorch nn.Linear default bias init: U(-1/sqrt(fan_in), 1/sqrt(fan_in))
    bound = 1.0 / jnp.sqrt(float(fan_in))
    return jax.random.uniform(
        key, (1, fan_out), dtype=jnp.float32, minval=-bound, maxval=bound
    )


def init_params(key):
    ks = jax.random.split(key, 6)
    w1 = xavier_uniform(ks[0], D_IN, H1)
    b1 = linear_bias(ks[1], D_IN, H1)
    w2 = xavier_uniform(ks[2], H1, H2)
    b2 = linear_bias(ks[3], H1, H2)
    w3 = xavier_uniform(ks[4], H2, D_OUT)
    b3 = linear_bias(ks[5], H2, D_OUT)
    return (w1, b1, w2, b2, w3, b3)


def ref_forward(x, params):
    # Pure-JAX reference with identical numerics (bf16 operands, f32 accumulation).
    w1, b1, w2, b2, w3, b3 = params
    h = jnp.dot(x.astype(jnp.bfloat16), w1.astype(jnp.bfloat16),
                preferred_element_type=jnp.float32)
    h = jnp.maximum(h + b1, 0.0)
    h = jnp.dot(h.astype(jnp.bfloat16), w2.astype(jnp.bfloat16),
                preferred_element_type=jnp.float32)
    h = jnp.maximum(h + b2, 0.0)
    h = jnp.dot(h.astype(jnp.bfloat16), w3.astype(jnp.bfloat16),
                preferred_element_type=jnp.float32)
    return h + b3


if __name__ == "__main__":
    key = jax.random.PRNGKey(0)
    k_params, k_x = jax.random.split(key)
    params = init_params(k_params)
    packed = pack_params(params)

    B = 8
    x = jax.random.normal(k_x, (B, D_IN), dtype=jnp.float32)

    out = mlp_forward(x, packed)
    out = jax.block_until_ready(out)

    ref = ref_forward(x, params)
    assert out.shape == (B, D_OUT)
    assert jnp.allclose(out, ref, atol=1e-2, rtol=1e-2)

    print("KERNEL_OK")
</pallas_src>

<mosaic_0001>
module attributes {stable_mosaic.version = 11 : i64} {
  func.func @mlp_kernel(%arg0: i32, %arg1: memref<8x784xf32, #tpu.memory_space<vmem>>, %arg2: memref<784x128xbf16, #tpu.memory_space<vmem>>, %arg3: memref<128x128xbf16, #tpu.memory_space<vmem>>, %arg4: memref<128x128xbf16, #tpu.memory_space<vmem>>, %arg5: memref<8x128xf32, #tpu.memory_space<vmem>>, %arg6: memref<8x128xf32, #tpu.memory_space<vmem>>) attributes {dimension_semantics = [#tpu.dimension_semantics<parallel>], iteration_bounds = array<i64: 1>, scalar_prefetch = 0 : i64, scratch_operands = 0 : i64, tpu.core_type = #tpu.core_type<tc>, window_params = [{transform_indices = @transform_0, window_bounds = array<i64: 8, 784>}, {pipeline_mode = #tpu.pipeline_mode<synchronous>, transform_indices = @transform_1, window_bounds = array<i64: 784, 128>}, {pipeline_mode = #tpu.pipeline_mode<synchronous>, transform_indices = @transform_2, window_bounds = array<i64: 128, 128>}, {pipeline_mode = #tpu.pipeline_mode<synchronous>, transform_indices = @transform_3, window_bounds = array<i64: 128, 128>}, {pipeline_mode = #tpu.pipeline_mode<synchronous>, transform_indices = @transform_4, window_bounds = array<i64: 8, 128>}, {transform_indices = @transform_5, window_bounds = array<i64: 8, 128>}]} {
    %c0 = arith.constant 0 : index
    %c0_0 = arith.constant 0 : index
    %0 = vector.load %arg1[%c0, %c0_0] : memref<8x784xf32, #tpu.memory_space<vmem>>, vector<8x784xf32>
    %1 = arith.truncf %0 : vector<8x784xf32> to vector<8x784xbf16>
    %c0_1 = arith.constant 0 : index
    %c0_2 = arith.constant 0 : index
    %2 = vector.load %arg5[%c0_1, %c0_2] : memref<8x128xf32, #tpu.memory_space<vmem>>, vector<1x128xf32>
    %c1 = arith.constant 1 : index
    %c0_3 = arith.constant 0 : index
    %3 = vector.load %arg5[%c1, %c0_3] : memref<8x128xf32, #tpu.memory_space<vmem>>, vector<1x128xf32>
    %c2 = arith.constant 2 : index
    %c0_4 = arith.constant 0 : index
    %4 = vector.load %arg5[%c2, %c0_4] : memref<8x128xf32, #tpu.memory_space<vmem>>, vector<1x128xf32>
    %c0_5 = arith.constant 0 : index
    %c0_6 = arith.constant 0 : index
    %5 = vector.load %arg2[%c0_5, %c0_6] : memref<784x128xbf16, #tpu.memory_space<vmem>>, vector<784x128xbf16>
    %cst = arith.constant dense<0.000000e+00> : vector<8x128xf32>
    %6 = tpu.matmul %1, %5, %cst {dimension_numbers = #tpu.dot_dimension_numbers<[1], [0], [0], [1], [0, 0, 1, 1], [], []>} : vector<8x784xbf16>, vector<784x128xbf16>, vector<8x128xf32> -> vector<8x128xf32>
    %7 = vector.broadcast %2 : vector<1x128xf32> to vector<8x128xf32>
    %8 = arith.addf %6, %7 : vector<8x128xf32>
    %cst_7 = arith.constant 0.000000e+00 : f32
    %9 = vector.broadcast %cst_7 : f32 to vector<8x128xf32>
    %10 = arith.maximumf %8, %9 : vector<8x128xf32>
    %11 = arith.truncf %10 : vector<8x128xf32> to vector<8x128xbf16>
    %c0_8 = arith.constant 0 : index
    %c0_9 = arith.constant 0 : index
    %12 = vector.load %arg3[%c0_8, %c0_9] : memref<128x128xbf16, #tpu.memory_space<vmem>>, vector<128x128xbf16>
    %cst_10 = arith.constant dense<0.000000e+00> : vector<8x128xf32>
    %13 = tpu.matmul %11, %12, %cst_10 {dimension_numbers = #tpu.dot_dimension_numbers<[1], [0], [0], [1], [0, 0, 1, 1], [], []>} : vector<8x128xbf16>, vector<128x128xbf16>, vector<8x128xf32> -> vector<8x128xf32>
    %14 = vector.broadcast %3 : vector<1x128xf32> to vector<8x128xf32>
    %15 = arith.addf %13, %14 : vector<8x128xf32>
    %cst_11 = arith.constant 0.000000e+00 : f32
    %16 = vector.broadcast %cst_11 : f32 to vector<8x128xf32>
    %17 = arith.maximumf %15, %16 : vector<8x128xf32>
    %18 = arith.truncf %17 : vector<8x128xf32> to vector<8x128xbf16>
    %c0_12 = arith.constant 0 : index
    %c0_13 = arith.constant 0 : index
    %19 = vector.load %arg4[%c0_12, %c0_13] : memref<128x128xbf16, #tpu.memory_space<vmem>>, vector<128x128xbf16>
    %cst_14 = arith.constant dense<0.000000e+00> : vector<8x128xf32>
    %20 = tpu.matmul %18, %19, %cst_14 {dimension_numbers = #tpu.dot_dimension_numbers<[1], [0], [0], [1], [0, 0, 1, 1], [], []>} : vector<8x128xbf16>, vector<128x128xbf16>, vector<8x128xf32> -> vector<8x128xf32>
    %21 = vector.broadcast %4 : vector<1x128xf32> to vector<8x128xf32>
    %22 = arith.addf %20, %21 : vector<8x128xf32>
    %c0_15 = arith.constant 0 : index
    %c0_16 = arith.constant 0 : index
    %23 = vector.load %arg6[%c0_15, %c0_16] : memref<8x128xf32, #tpu.memory_space<vmem>>, vector<8x128xf32>
    tpu.vector_store %arg6[%c0_15, %c0_16], %22 {strides = array<i32>} : memref<8x128xf32, #tpu.memory_space<vmem>>, vector<8x128xf32>,
    return
  }
  func.func @transform_0(%arg0: i32) -> (i32, i32) {
    %c0_i32 = arith.constant 0 : i32
    %c0_i32_0 = arith.constant 0 : i32
    return %arg0, %c0_i32 : i32, i32
  }
  func.func @transform_1(%arg0: i32) -> (i32, i32) {
    %c0_i32 = arith.constant 0 : i32
    %c0_i32_0 = arith.constant 0 : i32
    %c0_i32_1 = arith.constant 0 : i32
    return %c0_i32, %c0_i32_0 : i32, i32
  }
  func.func @transform_2(%arg0: i32) -> (i32, i32) {
    %c0_i32 = arith.constant 0 : i32
    %c0_i32_0 = arith.constant 0 : i32
    %c0_i32_1 = arith.constant 0 : i32
    return %c0_i32, %c0_i32_0 : i32, i32
  }
  func.func @transform_3(%arg0: i32) -> (i32, i32) {
    %c0_i32 = arith.constant 0 : i32
    %c0_i32_0 = arith.constant 0 : i32
    %c0_i32_1 = arith.constant 0 : i32
    return %c0_i32, %c0_i32_0 : i32, i32
  }
  func.func @transform_4(%arg0: i32) -> (i32, i32) {
    %c0_i32 = arith.constant 0 : i32
    %c0_i32_0 = arith.constant 0 : i32
    %c0_i32_1 = arith.constant 0 : i32
    return %c0_i32, %c0_i32_0 : i32, i32
  }
  func.func @transform_5(%arg0: i32) -> (i32, i32) {
    %c0_i32 = arith.constant 0 : i32
    %c0_i32_0 = arith.constant 0 : i32
    return %arg0, %c0_i32 : i32, i32
  }
}

</mosaic_0001>

<llo_original>
// kernel: mlp_forward.1
$region0: #{mlp_forward.1}
  #allocation0 [shape = 'u32[]', space=smem, size = 0x4, offset = 0x4, fixed_abs, tag = 'smem constant byte address 0x4 - core index']
  #allocation1 [shape = 'u32[144,128]{1,0:T(1,128)}', space=vmem, size = 0x12000, scoped, tag = 'internal scratch']
  %s0 = inlined_call_operand.hbm [shape: f32[8,784], index: 0, kind: input, shape index: {}]
  %s1 = inlined_call_operand.hbm [shape: bf16[784,128], index: 1, kind: input, shape index: {}]
  %s2 = inlined_call_operand.hbm [shape: bf16[128,128], index: 2, kind: input, shape index: {}]
  %s3 = inlined_call_operand.hbm [shape: bf16[128,128], index: 3, kind: input, shape index: {}]
  %s4 = inlined_call_operand.vmem [shape: f32[8,128], index: 4, kind: input, shape index: {}]
  %s5 = inlined_call_operand.hbm [shape: f32[8,128], index: 5, kind: output, shape index: {}]
  %s6 = sld [smem:[#allocation0]]
  $region46: #{mlp_forward.1} parent=0
    _
  %s8 = ssub.s32 1, %s6
  %s9 = scalar_select 0, %s8, %s6
  $region1: #{mlp_forward.1} parent=0
    #allocation2 [shape = 'u8[28672]{0}', space=vmem, size = 0x7000, scoped, tag = 'input window, operand 0, single buffered']
    #allocation3 [shape = 's32[1]{0}', space=sflag, size = 0x4, scoped, tag = 'scoped memory for mlp_forward.1']
    #allocation4 [shape = 's32[1]{0}', space=sflag, size = 0x4, scoped, tag = 'scoped memory for mlp_forward.1']
    #allocation5 [shape = 'u8[200704]{0}', space=vmem, size = 0x31000, scoped, tag = 'input window, operand 1, single buffered']
    #allocation6 [shape = 's32[1]{0}', space=sflag, size = 0x4, scoped, tag = 'scoped memory for mlp_forward.1']
    #allocation7 [shape = 'u8[32768]{0}', space=vmem, size = 0x8000, scoped, tag = 'input window, operand 2, single buffered']
    #allocation8 [shape = 'u8[32768]{0}', space=vmem, size = 0x8000, scoped, tag = 'input window, operand 3, single buffered']
    #allocation9 [shape = 's32[1]{0}', space=sflag, size = 0x4, scoped, tag = 'scoped memory for mlp_forward.1']
    #allocation10 [shape = 'u8[4096]{0}', space=vmem, size = 0x1000, scoped, tag = 'output window, operand 0, single buffered']
    %10 = vsyncpa [#allocation3], 0
    %11 = vsyncpa [#allocation6], 0
    %12 = vsyncpa [#allocation9], 0
    %13 = vsyncpa [#allocation4], 0
    // Predicated region
    $region2: #{mlp_forward.1} parent=1 // pred_check
      _
    $region3: #{mlp_forward.1} parent=1 // pred_check_branch
      %15 = sbr.rel (0) target = $region5
    $region4: #{mlp_forward.1} parent=1 // pred_region
      %s17 = ssub.s32 896, 896
      %18 = vsyncadd [#allocation3], %s17
      %s20 = sshll.u32 [#allocation2], 4
      %s21 = int_to_ptr.vmem [resolvable:$true] %s20
      %23 = dma.hbm_to_vmem [thread:$0]  %s0, 896, %s21, [#allocation3]
    $region5: #{mlp_forward.1} parent=1 // pred_fallthru
      _
    // Predicated region
    $region6: #{mlp_forward.1} parent=1 // pred_check
      _
    $region7: #{mlp_forward.1} parent=1 // pred_check_branch
      %25 = sbr.rel (0) target = $region9
    $region8: #{mlp_forward.1} parent=1 // pred_region
      %s27 = ssub.s32 6272, 6272
      %28 = vsyncadd [#allocation6], %s27
      %s29 = sshll.u32 [#allocation5], 4
      %s30 = int_to_ptr.vmem [resolvable:$true] %s29
      %35 = dma.hbm_to_vmem [thread:$0]  %s1, 6272, %s30, [#allocation6], 64, 64, 4
    $region9: #{mlp_forward.1} parent=1 // pred_fallthru
      _
    // Predicated region
    $region10: #{mlp_forward.1} parent=1 // pred_check
      _
    $region11: #{mlp_forward.1} parent=1 // pred_check_branch
      %37 = sbr.rel (0) target = $region13
    $region12: #{mlp_forward.1} parent=1 // pred_region
      %s39 = ssub.s32 1024, 1024
      %40 = vsyncadd [#allocation6], %s39
      %s41 = sshll.u32 [#allocation7], 4
      %s42 = int_to_ptr.vmem [resolvable:$true] %s41
      %47 = dma.hbm_to_vmem [thread:$0]  %s2, 1024, %s42, [#allocation6], 64, 64, 4
    $region13: #{mlp_forward.1} parent=1 // pred_fallthru
      _
    // Predicated region
    $region14: #{mlp_forward.1} parent=1 // pred_check
      _
    $region15: #{mlp_forward.1} parent=1 // pred_check_branch
      %49 = sbr.rel (0) target = $region17
    $region16: #{mlp_forward.1} parent=1 // pred_region
      %s51 = ssub.s32 1024, 1024
      %52 = vsyncadd [#allocation9], %s51
      %s53 = sshll.u32 [#allocation8], 4
      %s54 = int_to_ptr.vmem [resolvable:$true] %s53
      %59 = dma.hbm_to_vmem [thread:$0]  %s3, 1024, %s54, [#allocation9], 64, 64, 4
    $region17: #{mlp_forward.1} parent=1 // pred_fallthru
      _
    // Predicated region
    $region18: #{mlp_forward.1} parent=1 // pred_check
      _
    $region19: #{mlp_forward.1} parent=1 // pred_check_branch
      %61 = sbr.rel (0) target = $region21
    $region20: #{mlp_forward.1} parent=1 // pred_region
      _
    $region21: #{mlp_forward.1} parent=1 // pred_fallthru
      _
    // Predicated region
    $region22: #{mlp_forward.1} parent=1 // pred_check
      _
    $region23: #{mlp_forward.1} parent=1 // pred_check_branch
      %63 = sbr.rel (0) target = $region25
    $region24: #{mlp_forward.1} parent=1 // pred_region
      %64 = dma.done [#allocation3], 896
    $region25: #{mlp_forward.1} parent=1 // pred_fallthru
      _
    // Predicated region
    $region26: #{mlp_forward.1} parent=1 // pred_check
      _
    $region27: #{mlp_forward.1} parent=1 // pred_check_branch
      %66 = sbr.rel (0) target = $region29
    $region28: #{mlp_forward.1} parent=1 // pred_region
      %67 = dma.done [#allocation6], 6272
    $region29: #{mlp_forward.1} parent=1 // pred_fallthru
      _
    // Predicated region
    $region30: #{mlp_forward.1} parent=1 // pred_check
      _
    $region31: #{mlp_forward.1} parent=1 // pred_check_branch
      %69 = sbr.rel (0) target = $region33
    $region32: #{mlp_forward.1} parent=1 // pred_region
      %70 = dma.done [#allocation6], 1024
    $region33: #{mlp_forward.1} parent=1 // pred_fallthru
      _
    // Predicated region
    $region34: #{mlp_forward.1} parent=1 // pred_check
      _
    $region35: #{mlp_forward.1} parent=1 // pred_check_branch
      %72 = sbr.rel (0) target = $region37
    $region36: #{mlp_forward.1} parent=1 // pred_region
      %73 = dma.done [#allocation9], 1024
    $region37: #{mlp_forward.1} parent=1 // pred_fallthru
      _
    %v75 = vld [vmem:[#allocation2] sm:$0xff]
    %v76 = vld [vmem:[#allocation2 + $0x8] sm:$0xff]
    %v77 = vld [vmem:[#allocation2 + $0x10] sm:$0xff]
    %v78 = vld [vmem:[#allocation2 + $0x18] sm:$0xff]
    %v79 = vld [vmem:[#allocation2 + $0x20] sm:$0xff]
    %v80 = vld [vmem:[#allocation2 + $0x28] sm:$0xff]
    %v81 = vld [vmem:[#allocation2 + $0x30] sm:$0xff]
    %v82 = vpack.c.bf16 %v75, %v75
    %v83 = vpack.c.bf16 %v76, %v76
    %v84 = vpack.c.bf16 %v77, %v77
    %v85 = vpack.c.bf16 %v78, %v78
    %v86 = vpack.c.bf16 %v79, %v79
    %v87 = vpack.c.bf16 %v80, %v80
    %v88 = vpack.c.bf16 %v81, %v81
    %v89 = vld [vmem:[%s4] sm:$0x1]
    %v90 = vld [vmem:[%s4 + $0x1] sm:$0x1]
    %v91 = vld [vmem:[%s4 + $0x2] sm:$0x1]
    %v92 = vld [vmem:[#allocation5] sm:$0xf]
    %v93 = vld [vmem:[#allocation5 + $0x4] sm:$0xf]
    %v94 = vld [vmem:[#allocation5 + $0x8] sm:$0xf]
    %v95 = vld [vmem:[#allocation5 + $0xc] sm:$0xf]
    %v96 = vld [vmem:[#allocation5 + $0x10] sm:$0xf]
    %v97 = vld [vmem:[#allocation5 + $0x14] sm:$0xf]
    %v98 = vld [vmem:[#allocation5 + $0x18] sm:$0xf]
    %v99 = vld [vmem:[#allocation5 + $0x1c] sm:$0xf]
    %v100 = vld [vmem:[#allocation5 + $0x20] sm:$0xf]
    %v101 = vld [vmem:[#allocation5 + $0x24] sm:$0xf]
    %v102 = vld [vmem:[#allocation5 + $0x28] sm:$0xf]
    %v103 = vld [vmem:[#allocation5 + $0x2c] sm:$0xf]
    %v104 = vld [vmem:[#allocation5 + $0x30] sm:$0xf]
    %v105 = vld [vmem:[#allocation5 + $0x34] sm:$0xf]
    %v106 = vld [vmem:[#allocation5 + $0x38] sm:$0xf]
    %v107 = vld [vmem:[#allocation5 + $0x3c] sm:$0xf]
    %v108 = vld [vmem:[#allocation5 + $0x40] sm:$0xf]
    %v109 = vld [vmem:[#allocation5 + $0x44] sm:$0xf]
    %v110 = vld [vmem:[#allocation5 + $0x48] sm:$0xf]
    %v111 = vld [vmem:[#allocation5 + $0x4c] sm:$0xf]
    %v112 = vld [vmem:[#allocation5 + $0x50] sm:$0xf]
    %v113 = vld [vmem:[#allocation5 + $0x54] sm:$0xf]
    %v114 = vld [vmem:[#allocation5 + $0x58] sm:$0xf]
    %v115 = vld [vmem:[#allocation5 + $0x5c] sm:$0xf]
    %v116 = vld [vmem:[#allocation5 + $0x60] sm:$0xf]
    %v117 = vld [vmem:[#allocation5 + $0x64] sm:$0xf]
    %v118 = vld [vmem:[#allocation5 + $0x68] sm:$0xf]
    %v119 = vld [vmem:[#allocation5 + $0x6c] sm:$0xf]
    %v120 = vld [vmem:[#allocation5 + $0x70] sm:$0xf]
    %v121 = vld [vmem:[#allocation5 + $0x74] sm:$0xf]
    %v122 = vld [vmem:[#allocation5 + $0x78] sm:$0xf]
    %v123 = vld [vmem:[#allocation5 + $0x7c] sm:$0xf]
    %v124 = vld [vmem:[#allocation5 + $0x80] sm:$0xf]
    %v125 = vld [vmem:[#allocation5 + $0x84] sm:$0xf]
    %v126 = vld [vmem:[#allocation5 + $0x88] sm:$0xf]
    %v127 = vld [vmem:[#allocation5 + $0x8c] sm:$0xf]
    %v128 = vld [vmem:[#allocation5 + $0x90] sm:$0xf]
    %v129 = vld [vmem:[#allocation5 + $0x94] sm:$0xf]
    %v130 = vld [vmem:[#allocation5 + $0x98] sm:$0xf]
    %v131 = vld [vmem:[#allocation5 + $0x9c] sm:$0xf]
    %v132 = vld [vmem:[#allocation5 + $0xa0] sm:$0xf]
    %v133 = vld [vmem:[#allocation5 + $0xa4] sm:$0xf]
    %v134 = vld [vmem:[#allocation5 + $0xa8] sm:$0xf]
    %v135 = vld [vmem:[#allocation5 + $0xac] sm:$0xf]
    %v136 = vld [vmem:[#allocation5 + $0xb0] sm:$0xf]
    %v137 = vld [vmem:[#allocation5 + $0xb4] sm:$0xf]
    %v138 = vld [vmem:[#allocation5 + $0xb8] sm:$0xf]
    %v139 = vld [vmem:[#allocation5 + $0xbc] sm:$0xf]
    %v140 = vld [vmem:[#allocation5 + $0xc0] sm:$0xf]
    %v141 = vld [vmem:[#allocation5 + $0xc4] sm:$0xf]
    %v142 = vld [vmem:[#allocation5 + $0xc8] sm:$0xf]
    %v143 = vld [vmem:[#allocation5 + $0xcc] sm:$0xf]
    %v144 = vld [vmem:[#allocation5 + $0xd0] sm:$0xf]
    %v145 = vld [vmem:[#allocation5 + $0xd4] sm:$0xf]
    %v146 = vld [vmem:[#allocation5 + $0xd8] sm:$0xf]
    %v147 = vld [vmem:[#allocation5 + $0xdc] sm:$0xf]
    %v148 = vld [vmem:[#allocation5 + $0xe0] sm:$0xf]
    %v149 = vld [vmem:[#allocation5 + $0xe4] sm:$0xf]
    %v150 = vld [vmem:[#allocation5 + $0xe8] sm:$0xf]
    %v151 = vld [vmem:[#allocation5 + $0xec] sm:$0xf]
    %v152 = vld [vmem:[#allocation5 + $0xf0] sm:$0xf]
    %v153 = vld [vmem:[#allocation5 + $0xf4] sm:$0xf]
    %v154 = vld [vmem:[#allocation5 + $0xf8] sm:$0xf]
    %v155 = vld [vmem:[#allocation5 + $0xfc] sm:$0xf]
    %v156 = vld [vmem:[#allocation5 + $0x100] sm:$0xf]
    %v157 = vld [vmem:[#allocation5 + $0x104] sm:$0xf]
    %v158 = vld [vmem:[#allocation5 + $0x108] sm:$0xf]
    %v159 = vld [vmem:[#allocation5 + $0x10c] sm:$0xf]
    %v160 = vld [vmem:[#allocation5 + $0x110] sm:$0xf]
    %v161 = vld [vmem:[#allocation5 + $0x114] sm:$0xf]
    %v162 = vld [vmem:[#allocation5 + $0x118] sm:$0xf]
    %v163 = vld [vmem:[#allocation5 + $0x11c] sm:$0xf]
    %v164 = vld [vmem:[#allocation5 + $0x120] sm:$0xf]
    %v165 = vld [vmem:[#allocation5 + $0x124] sm:$0xf]
    %v166 = vld [vmem:[#allocation5 + $0x128] sm:$0xf]
    %v167 = vld [vmem:[#allocation5 + $0x12c] sm:$0xf]
    %v168 = vld [vmem:[#allocation5 + $0x130] sm:$0xf]
    %v169 = vld [vmem:[#allocation5 + $0x134] sm:$0xf]
    %v170 = vld [vmem:[#allocation5 + $0x138] sm:$0xf]
    %v171 = vld [vmem:[#allocation5 + $0x13c] sm:$0xf]
    %v172 = vld [vmem:[#allocation5 + $0x140] sm:$0xf]
    %v173 = vld [vmem:[#allocation5 + $0x144] sm:$0xf]
    %v174 = vld [vmem:[#allocation5 + $0x148] sm:$0xf]
    %v175 = vld [vmem:[#allocation5 + $0x14c] sm:$0xf]
    %v176 = vld [vmem:[#allocation5 + $0x150] sm:$0xf]
    %v177 = vld [vmem:[#allocation5 + $0x154] sm:$0xf]
    %v178 = vld [vmem:[#allocation5 + $0x158] sm:$0xf]
    %v179 = vld [vmem:[#allocation5 + $0x15c] sm:$0xf]
    %v180 = vld [vmem:[#allocation5 + $0x160] sm:$0xf]
    %v181 = vld [vmem:[#allocation5 + $0x164] sm:$0xf]
    %v182 = vld [vmem:[#allocation5 + $0x168] sm:$0xf]
    %v183 = vld [vmem:[#allocation5 + $0x16c] sm:$0xf]
    %v184 = vld [vmem:[#allocation5 + $0x170] sm:$0xf]
    %v185 = vld [vmem:[#allocation5 + $0x174] sm:$0xf]
    %v186 = vld [vmem:[#allocation5 + $0x178] sm:$0xf]
    %v187 = vld [vmem:[#allocation5 + $0x17c] sm:$0xf]
    %v188 = vld [vmem:[#allocation5 + $0x180] sm:$0xf]
    %v189 = vld [vmem:[#allocation5 + $0x184] sm:$0xf]
    %v190 = vlaneseq
    %v191 = vshrl.u32 %v190, 7
    %v192 = vsub.s32 0, %v191
    %v193 = vrot.slane %v89, %v192
    %v292 = vunpack.c.l.b16 %v92
    %v293 = vunpack.c.l.b16 %v93
    %v294 = vunpack.c.l.b16 %v94
    %v295 = vunpack.c.l.b16 %v95
    %v296 = vunpack.c.l.b16 %v96
    %v297 = vunpack.c.l.b16 %v97
    %v298 = vunpack.c.l.b16 %v98
    %v299 = vunpack.c.l.b16 %v99
    %v300 = vunpack.c.l.b16 %v100
    %v301 = vunpack.c.l.b16 %v101
    %v302 = vunpack.c.l.b16 %v102
    %v303 = vunpack.c.l.b16 %v103
    %v304 = vunpack.c.l.b16 %v104
    %v305 = vunpack.c.l.b16 %v105
    %v306 = vunpack.c.l.b16 %v106
    %v307 = vunpack.c.l.b16 %v107
    %v308 = vunpack.c.l.b16 %v108
    %v309 = vunpack.c.l.b16 %v109
    %v310 = vunpack.c.l.b16 %v110
    %v311 = vunpack.c.l.b16 %v111
    %v312 = vunpack.c.l.b16 %v112
    %v313 = vunpack.c.l.b16 %v113
    %v314 = vunpack.c.l.b16 %v114
    %v315 = vunpack.c.l.b16 %v115
    %v316 = vunpack.c.l.b16 %v116
    %v317 = vunpack.c.l.b16 %v117
    %v318 = vunpack.c.l.b16 %v118
    %v319 = vunpack.c.l.b16 %v119
    %v320 = vunpack.c.l.b16 %v120
    %v321 = vunpack.c.l.b16 %v121
    %v322 = vunpack.c.l.b16 %v122
    %v323 = vunpack.c.l.b16 %v123
    %v324 = vunpack.c.l.b16 %v124
    %v325 = vunpack.c.l.b16 %v125
    %v326 = vunpack.c.l.b16 %v126
    %v327 = vunpack.c.l.b16 %v127
    %v328 = vunpack.c.l.b16 %v128
    %v329 = vunpack.c.l.b16 %v129
    %v330 = vunpack.c.l.b16 %v130
    %v331 = vunpack.c.l.b16 %v131
    %v332 = vunpack.c.l.b16 %v132
    %v333 = vunpack.c.l.b16 %v133
    %v334 = vunpack.c.l.b16 %v134
    %v335 = vunpack.c.l.b16 %v135
    %v336 = vunpack.c.l.b16 %v136
    %v337 = vunpack.c.l.b16 %v137
    %v338 = vunpack.c.l.b16 %v138
    %v339 = vunpack.c.l.b16 %v139
    %v340 = vunpack.c.l.b16 %v140
    %v341 = vunpack.c.l.b16 %v141
    %v342 = vunpack.c.l.b16 %v142
    %v343 = vunpack.c.l.b16 %v143
    %v344 = vunpack.c.l.b16 %v144
    %v345 = vunpack.c.l.b16 %v145
    %v346 = vunpack.c.l.b16 %v146
    %v347 = vunpack.c.l.b16 %v147
    %v348 = vunpack.c.l.b16 %v148
    %v349 = vunpack.c.l.b16 %v149
    %v350 = vunpack.c.l.b16 %v150
    %v351 = vunpack.c.l.b16 %v151
    %v352 = vunpack.c.l.b16 %v152
    %v353 = vunpack.c.l.b16 %v153
    %v354 = vunpack.c.l.b16 %v154
    %v355 = vunpack.c.l.b16 %v155
    %v356 = vunpack.c.l.b16 %v156
    %v357 = vunpack.c.l.b16 %v157
    %v358 = vunpack.c.l.b16 %v158
    %v359 = vunpack.c.l.b16 %v159
    %v360 = vunpack.c.l.b16 %v160
    %v361 = vunpack.c.l.b16 %v161
    %v362 = vunpack.c.l.b16 %v162
    %v363 = vunpack.c.l.b16 %v163
    %v364 = vunpack.c.l.b16 %v164
    %v365 = vunpack.c.l.b16 %v165
    %v366 = vunpack.c.l.b16 %v166
    %v367 = vunpack.c.l.b16 %v167
    %v368 = vunpack.c.l.b16 %v168
    %v369 = vunpack.c.l.b16 %v169
    %v370 = vunpack.c.l.b16 %v170
    %v371 = vunpack.c.l.b16 %v171
    %v372 = vunpack.c.l.b16 %v172
    %v373 = vunpack.c.l.b16 %v173
    %v374 = vunpack.c.l.b16 %v174
    %v375 = vunpack.c.l.b16 %v175
    %v376 = vunpack.c.l.b16 %v176
    %v377 = vunpack.c.l.b16 %v177
    %v378 = vunpack.c.l.b16 %v178
    %v379 = vunpack.c.l.b16 %v179
    %v380 = vunpack.c.l.b16 %v180
    %v381 = vunpack.c.l.b16 %v181
    %v382 = vunpack.c.l.b16 %v182
    %v383 = vunpack.c.l.b16 %v183
    %v384 = vunpack.c.l.b16 %v184
    %v385 = vunpack.c.l.b16 %v185
    %v386 = vunpack.c.l.b16 %v186
    %v387 = vunpack.c.l.b16 %v187
    %v388 = vunpack.c.l.b16 %v188
    %v389 = vunpack.c.l.b16 %v189
    %v390 = vpack.c.b16 %v293, %v292
    %v391 = vpack.c.b16 %v295, %v294
    %v392 = vpack.c.b16 %v297, %v296
    %v393 = vpack.c.b16 %v299, %v298
    %v394 = vpack.c.b16 %v301, %v300
    %v395 = vpack.c.b16 %v303, %v302
    %v396 = vpack.c.b16 %v305, %v304
    %v397 = vpack.c.b16 %v307, %v306
    %v398 = vpack.c.b16 %v309, %v308
    %v399 = vpack.c.b16 %v311, %v310
    %v400 = vpack.c.b16 %v313, %v312
    %v401 = vpack.c.b16 %v315, %v314
    %v402 = vpack.c.b16 %v317, %v316
    %v403 = vpack.c.b16 %v319, %v318
    %v404 = vpack.c.b16 %v321, %v320
    %v405 = vpack.c.b16 %v323, %v322
    %v406 = vpack.c.b16 %v325, %v324
    %v407 = vpack.c.b16 %v327, %v326
    %v408 = vpack.c.b16 %v329, %v328
    %v409 = vpack.c.b16 %v331, %v330
    %v410 = vpack.c.b16 %v333, %v332
    %v411 = vpack.c.b16 %v335, %v334
    %v412 = vpack.c.b16 %v337, %v336
    %v413 = vpack.c.b16 %v339, %v338
    %v414 = vpack.c.b16 %v341, %v340
    %v415 = vpack.c.b16 %v343, %v342
    %v416 = vpack.c.b16 %v345, %v344
    %v417 = vpack.c.b16 %v347, %v346
    %v418 = vpack.c.b16 %v349, %v348
    %v419 = vpack.c.b16 %v351, %v350
    %v420 = vpack.c.b16 %v353, %v352
    %v421 = vpack.c.b16 %v355, %v354
    %v422 = vpack.c.b16 %v357, %v356
    %v423 = vpack.c.b16 %v359, %v358
    %v424 = vpack.c.b16 %v361, %v360
    %v425 = vpack.c.b16 %v363, %v362
    %v426 = vpack.c.b16 %v365, %v364
    %v427 = vpack.c.b16 %v367, %v366
    %v428 = vpack.c.b16 %v369, %v368
    %v429 = vpack.c.b16 %v371, %v370
    %v430 = vpack.c.b16 %v373, %v372
    %v431 = vpack.c.b16 %v375, %v374
    %v432 = vpack.c.b16 %v377, %v376
    %v433 = vpack.c.b16 %v379, %v378
    %v434 = vpack.c.b16 %v381, %v380
    %v435 = vpack.c.b16 %v383, %v382
    %v436 = vpack.c.b16 %v385, %v384
    %v437 = vpack.c.b16 %v387, %v386
    %v438 = vpack.c.b16 %v389, %v388
    %vm488 = vcmask 130048
    %v490 = vsel %vm488, %v88, 0
    %492 = vmatprep.subr.bf16.mxu0 0
    %493 = vmatpush1.bf16.msra.mxu0 %v390
    %494 = vmatprep.subr.bf16.mxu0 0
    %495 = vmatpush1.bf16.msra.mxu0 %v391
    %496 = vmatprep.subr.bf16.mxu0 0
    %497 = vmatpush1.bf16.msra.mxu0 %v392
    %498 = vmatprep.subr.bf16.mxu0 0
    %499 = vmatpush1.bf16.msra.mxu0 %v393
    %500 = vmatprep.subr.bf16.mxu0 0
    %501 = vmatpush1.bf16.msra.mxu0 %v394
    %502 = vmatprep.subr.bf16.mxu0 0
    %503 = vmatpush1.bf16.msra.mxu0 %v395
    %504 = vmatprep.subr.bf16.mxu0 0
    %505 = vmatpush1.bf16.msra.mxu0 %v396
    %506 = vmatprep.subr.bf16.mxu0 0
    %507 = vmatpush1.bf16.msra.mxu0 %v397
    %508 = vmatprep.subr.bf16.mxu0 0
    %509 = vmatpush1.bf16.msra.mxu0 %v398
    %510 = vmatprep.subr.bf16.mxu0 0
    %511 = vmatpush1.bf16.msra.mxu0 %v399
    %512 = vmatprep.subr.bf16.mxu0 0
    %513 = vmatpush1.bf16.msra.mxu0 %v400
    %514 = vmatprep.subr.bf16.mxu0 0
    %515 = vmatpush1.bf16.msra.mxu0 %v401
    %516 = vmatprep.subr.bf16.mxu0 0
    %517 = vmatpush1.bf16.msra.mxu0 %v402
    %518 = vmatprep.subr.bf16.mxu0 0
    %519 = vmatpush1.bf16.msra.mxu0 %v403
    %520 = vmatprep.subr.bf16.mxu0 0
    %521 = vmatpush1.bf16.msra.mxu0 %v404
    %522 = vmatprep.subr.bf16.mxu0 0
    %523 = vmatpush1.bf16.msra.mxu0 %v405
    %524 = vmatprep.mubr.bf16.mxu0 %v83
    %525 = vmatmul.mubr.bf16.gmra.mrb[0].mxu0 %v82
    %v526 = vpop.f32.mrb[0].mxu0
    %v527 = vadd.f32 %v193, %v526
    %v528 = vpop.f32.mrb[0].mxu0
    %v529 = vpop.f32.mrb[0].mxu0
    %v530 = vpop.f32.mrb[0].mxu0
    %531 = vdwg.mxu0
    %532 = vmatprep.subr.bf16.mxu0 0
    %533 = vmatpush1.bf16.msra.mxu0 %v406
    %534 = vmatprep.subr.bf16.mxu0 0
    %535 = vmatpush1.bf16.msra.mxu0 %v407
    %536 = vmatprep.subr.bf16.mxu0 0
    %537 = vmatpush1.bf16.msra.mxu0 %v408
    %538 = vmatprep.subr.bf16.mxu0 0
    %539 = vmatpush1.bf16.msra.mxu0 %v409
    %540 = vmatprep.subr.bf16.mxu0 0
    %541 = vmatpush1.bf16.msra.mxu0 %v410
    %542 = vmatprep.subr.bf16.mxu0 0
    %543 = vmatpush1.bf16.msra.mxu0 %v411
    %544 = vmatprep.subr.bf16.mxu0 0
    %545 = vmatpush1.bf16.msra.mxu0 %v412
    %546 = vmatprep.subr.bf16.mxu0 0
    %547 = vmatpush1.bf16.msra.mxu0 %v413
    %548 = vmatprep.subr.bf16.mxu0 0
    %549 = vmatpush1.bf16.msra.mxu0 %v414
    %550 = vmatprep.subr.bf16.mxu0 0
    %551 = vmatpush1.bf16.msra.mxu0 %v415
    %552 = vmatprep.subr.bf16.mxu0 0
    %553 = vmatpush1.bf16.msra.mxu0 %v416
    %554 = vmatprep.subr.bf16.mxu0 0
    %555 = vmatpush1.bf16.msra.mxu0 %v417
    %556 = vmatprep.subr.bf16.mxu0 0
    %557 = vmatpush1.bf16.msra.mxu0 %v418
    %558 = vmatprep.subr.bf16.mxu0 0
    %559 = vmatpush1.bf16.msra.mxu0 %v419
    %560 = vmatprep.subr.bf16.mxu0 0
    %561 = vmatpush1.bf16.msra.mxu0 %v420
    %562 = vmatprep.subr.bf16.mxu0 0
    %563 = vmatpush1.bf16.msra.mxu0 %v421
    %564 = vmatprep.mubr.bf16.mxu0 %v85
    %565 = vmatmul.mubr.bf16.gmra.mrb[0].mxu0 %v84
    %v566 = vpop.f32.mrb[0].mxu0
    %v567 = vadd.f32 %v527, %v566
    %v568 = vpop.f32.mrb[0].mxu0
    %v569 = vpop.f32.mrb[0].mxu0
    %v570 = vpop.f32.mrb[0].mxu0
    %571 = vdwg.mxu0
    %572 = vmatprep.subr.bf16.mxu0 0
    %573 = vmatpush1.bf16.msra.mxu0 %v422
    %574 = vmatprep.subr.bf16.mxu0 0
    %575 = vmatpush1.bf16.msra.mxu0 %v423
    %576 = vmatprep.subr.bf16.mxu0 0
    %577 = vmatpush1.bf16.msra.mxu0 %v424
    %578 = vmatprep.subr.bf16.mxu0 0
    %579 = vmatpush1.bf16.msra.mxu0 %v425
    %580 = vmatprep.subr.bf16.mxu0 0
    %581 = vmatpush1.bf16.msra.mxu0 %v426
    %582 = vmatprep.subr.bf16.mxu0 0
    %583 = vmatpush1.bf16.msra.mxu0 %v427
    %584 = vmatprep.subr.bf16.mxu0 0
    %585 = vmatpush1.bf16.msra.mxu0 %v428
    %586 = vmatprep.subr.bf16.mxu0 0
    %587 = vmatpush1.bf16.msra.mxu0 %v429
    %588 = vmatprep.subr.bf16.mxu0 0
    %589 = vmatpush1.bf16.msra.mxu0 %v430
    %590 = vmatprep.subr.bf16.mxu0 0
    %591 = vmatpush1.bf16.msra.mxu0 %v431
    %592 = vmatprep.subr.bf16.mxu0 0
    %593 = vmatpush1.bf16.msra.mxu0 %v432
    %594 = vmatprep.subr.bf16.mxu0 0
    %595 = vmatpush1.bf16.msra.mxu0 %v433
    %596 = vmatprep.subr.bf16.mxu0 0
    %597 = vmatpush1.bf16.msra.mxu0 %v434
    %598 = vmatprep.subr.bf16.mxu0 0
    %599 = vmatpush1.bf16.msra.mxu0 %v435
    %600 = vmatprep.subr.bf16.mxu0 0
    %601 = vmatpush1.bf16.msra.mxu0 %v436
    %602 = vmatprep.subr.bf16.mxu0 0
    %603 = vmatpush1.bf16.msra.mxu0 %v437
    %604 = vmatprep.mubr.bf16.mxu0 %v87
    %605 = vmatmul.mubr.bf16.gmra.mrb[0].mxu0 %v86
    %v606 = vpop.f32.mrb[0].mxu0
    %v607 = vadd.f32 %v567, %v606
    %v608 = vpop.f32.mrb[0].mxu0
    %v609 = vpop.f32.mrb[0].mxu0
    %v610 = vpop.f32.mrb[0].mxu0
    %611 = vdwg.mxu0
    %612 = vmatprep.subr.bf16.mxu0 0
    %613 = vmatpush1.bf16.msra.mxu0 %v438
    %614 = vmatprep.subr.bf16.mxu0 0
    %615 = vmatpush1.bf16.msra.mxu0 0
    %616 = vmatprep.subr.bf16.mxu0 0
    %617 = vmatpush1.bf16.msra.mxu0 0
    %618 = vmatprep.subr.bf16.mxu0 0
    %619 = vmatpush1.bf16.msra.mxu0 0
    %620 = vmatprep.subr.bf16.mxu0 0
    %621 = vmatpush1.bf16.msra.mxu0 0
    %622 = vmatprep.subr.bf16.mxu0 0
    %623 = vmatpush1.bf16.msra.mxu0 0
    %624 = vmatprep.subr.bf16.mxu0 0
    %625 = vmatpush1.bf16.msra.mxu0 0
    %626 = vmatprep.subr.bf16.mxu0 0
    %627 = vmatpush1.bf16.msra.mxu0 0
    %628 = vmatprep.subr.bf16.mxu0 0
    %629 = vmatpush1.bf16.msra.mxu0 0
    %630 = vmatprep.subr.bf16.mxu0 0
    %631 = vmatpush1.bf16.msra.mxu0 0
    %632 = vmatprep.subr.bf16.mxu0 0
    %633 = vmatpush1.bf16.msra.mxu0 0
    %634 = vmatprep.subr.bf16.mxu0 0
    %635 = vmatpush1.bf16.msra.mxu0 0
    %636 = vmatprep.subr.bf16.mxu0 0
    %637 = vmatpush1.bf16.msra.mxu0 0
    %638 = vmatprep.subr.bf16.mxu0 0
    %639 = vmatpush1.bf16.msra.mxu0 0
    %640 = vmatprep.subr.bf16.mxu0 0
    %641 = vmatpush1.bf16.msra.mxu0 0
    %642 = vmatprep.subr.bf16.mxu0 0
    %643 = vmatpush1.bf16.msra.mxu0 0
    %644 = vmatprep.mubr.bf16.mxu0 0
    %645 = vmatmul.mubr.bf16.gmra.mrb[0].mxu0 %v490
    %v646 = vpop.f32.mrb[0].mxu0
    %v647 = vadd.f32 %v607, %v646
    %v648 = vpop.f32.mrb[0].mxu0
    %v649 = vpop.f32.mrb[0].mxu0
    %v650 = vpop.f32.mrb[0].mxu0
    %651 = vdwg.mxu0
    %v652 = vmax.f32 %v647, 0.0
    %v653 = vpack.c.bf16 %v652, %v652
    %v654 = vld [vmem:[#allocation7] sm:$0xf]
    %v655 = vld [vmem:[#allocation7 + $0x4] sm:$0xf]
    %v656 = vld [vmem:[#allocation7 + $0x8] sm:$0xf]
    %v657 = vld [vmem:[#allocation7 + $0xc] sm:$0xf]
    %v658 = vld [vmem:[#allocation7 + $0x10] sm:$0xf]
    %v659 = vld [vmem:[#allocation7 + $0x14] sm:$0xf]
    %v660 = vld [vmem:[#allocation7 + $0x18] sm:$0xf]
    %v661 = vld [vmem:[#allocation7 + $0x1c] sm:$0xf]
    %v662 = vld [vmem:[#allocation7 + $0x20] sm:$0xf]
    %v663 = vld [vmem:[#allocation7 + $0x24] sm:$0xf]
    %v664 = vld [vmem:[#allocation7 + $0x28] sm:$0xf]
    %v665 = vld [vmem:[#allocation7 + $0x2c] sm:$0xf]
    %v666 = vld [vmem:[#allocation7 + $0x30] sm:$0xf]
    %v667 = vld [vmem:[#allocation7 + $0x34] sm:$0xf]
    %v668 = vld [vmem:[#allocation7 + $0x38] sm:$0xf]
    %v669 = vld [vmem:[#allocation7 + $0x3c] sm:$0xf]
    %v670 = vlaneseq
    %v671 = vshrl.u32 %v670, 7
    %v672 = vsub.s32 0, %v671
    %v673 = vrot.slane %v90, %v672
    %v690 = vunpack.c.l.b16 %v654
    %v691 = vunpack.c.l.b16 %v655
    %v692 = vunpack.c.l.b16 %v656
    %v693 = vunpack.c.l.b16 %v657
    %v694 = vunpack.c.l.b16 %v658
    %v695 = vunpack.c.l.b16 %v659
    %v696 = vunpack.c.l.b16 %v660
    %v697 = vunpack.c.l.b16 %v661
    %v698 = vunpack.c.l.b16 %v662
    %v699 = vunpack.c.l.b16 %v663
    %v700 = vunpack.c.l.b16 %v664
    %v701 = vunpack.c.l.b16 %v665
    %v702 = vunpack.c.l.b16 %v666
    %v703 = vunpack.c.l.b16 %v667
    %v704 = vunpack.c.l.b16 %v668
    %v705 = vunpack.c.l.b16 %v669
    %v706 = vpack.c.b16 %v691, %v690
    %v707 = vpack.c.b16 %v693, %v692
    %v708 = vpack.c.b16 %v695, %v694
    %v709 = vpack.c.b16 %v697, %v696
    %v710 = vpack.c.b16 %v699, %v698
    %v711 = vpack.c.b16 %v701, %v700
    %v712 = vpack.c.b16 %v703, %v702
    %v713 = vpack.c.b16 %v705, %v704
    %722 = vmatprep.subr.bf16.mxu0 0
    %723 = vmatpush1.bf16.msra.mxu0 %v706
    %724 = vmatprep.subr.bf16.mxu0 0
    %725 = vmatpush1.bf16.msra.mxu0 %v707
    %726 = vmatprep.subr.bf16.mxu0 0
    %727 = vmatpush1.bf16.msra.mxu0 %v708
    %728 = vmatprep.subr.bf16.mxu0 0
    %729 = vmatpush1.bf16.msra.mxu0 %v709
    %730 = vmatprep.subr.bf16.mxu0 0
    %731 = vmatpush1.bf16.msra.mxu0 %v710
    %732 = vmatprep.subr.bf16.mxu0 0
    %733 = vmatpush1.bf16.msra.mxu0 %v711
    %734 = vmatprep.subr.bf16.mxu0 0
    %735 = vmatpush1.bf16.msra.mxu0 %v712
    %736 = vmatprep.subr.bf16.mxu0 0
    %737 = vmatpush1.bf16.msra.mxu0 %v713
    %738 = vmatprep.subr.bf16.mxu0 0
    %739 = vmatpush1.bf16.msra.mxu0 0
    %740 = vmatprep.subr.bf16.mxu0 0
    %741 = vmatpush1.bf16.msra.mxu0 0
    %742 = vmatprep.subr.bf16.mxu0 0
    %743 = vmatpush1.bf16.msra.mxu0 0
    %744 = vmatprep.subr.bf16.mxu0 0
    %745 = vmatpush1.bf16.msra.mxu0 0
    %746 = vmatprep.subr.bf16.mxu0 0
    %747 = vmatpush1.bf16.msra.mxu0 0
    %748 = vmatprep.subr.bf16.mxu0 0
    %749 = vmatpush1.bf16.msra.mxu0 0
    %750 = vmatprep.subr.bf16.mxu0 0
    %751 = vmatpush1.bf16.msra.mxu0 0
    %752 = vmatprep.subr.bf16.mxu0 0
    %753 = vmatpush1.bf16.msra.mxu0 0
    %754 = vmatprep.mubr.bf16.mxu0 0
    %755 = vmatmul.mubr.bf16.gmra.mrb[0].mxu0 %v653
    %v756 = vpop.f32.mrb[0].mxu0
    %v757 = vadd.f32 %v673, %v756
    %v758 = vpop.f32.mrb[0].mxu0
    %v759 = vpop.f32.mrb[0].mxu0
    %v760 = vpop.f32.mrb[0].mxu0
    %761 = vdwg.mxu0
    %v762 = vmax.f32 %v757, 0.0
    %v763 = vpack.c.bf16 %v762, %v762
    %v764 = vld [vmem:[#allocation8] sm:$0xf]
    %v765 = vld [vmem:[#allocation8 + $0x4] sm:$0xf]
    %v766 = vld [vmem:[#allocation8 + $0x8] sm:$0xf]
    %v767 = vld [vmem:[#allocation8 + $0xc] sm:$0xf]
    %v768 = vld [vmem:[#allocation8 + $0x10] sm:$0xf]
    %v769 = vld [vmem:[#allocation8 + $0x14] sm:$0xf]
    %v770 = vld [vmem:[#allocation8 + $0x18] sm:$0xf]
    %v771 = vld [vmem:[#allocation8 + $0x1c] sm:$0xf]
    %v772 = vld [vmem:[#allocation8 + $0x20] sm:$0xf]
    %v773 = vld [vmem:[#allocation8 + $0x24] sm:$0xf]
    %v774 = vld [vmem:[#allocation8 + $0x28] sm:$0xf]
    %v775 = vld [vmem:[#allocation8 + $0x2c] sm:$0xf]
    %v776 = vld [vmem:[#allocation8 + $0x30] sm:$0xf]
    %v777 = vld [vmem:[#allocation8 + $0x34] sm:$0xf]
    %v778 = vld [vmem:[#allocation8 + $0x38] sm:$0xf]
    %v779 = vld [vmem:[#allocation8 + $0x3c] sm:$0xf]
    %v780 = vlaneseq
    %v781 = vshrl.u32 %v780, 7
    %v782 = vsub.s32 0, %v781
    %v783 = vrot.slane %v91, %v782
    %v800 = vunpack.c.l.b16 %v764
    %v801 = vunpack.c.l.b16 %v765
    %v802 = vunpack.c.l.b16 %v766
    %v803 = vunpack.c.l.b16 %v767
    %v804 = vunpack.c.l.b16 %v768
    %v805 = vunpack.c.l.b16 %v769
    %v806 = vunpack.c.l.b16 %v770
    %v807 = vunpack.c.l.b16 %v771
    %v808 = vunpack.c.l.b16 %v772
    %v809 = vunpack.c.l.b16 %v773
    %v810 = vunpack.c.l.b16 %v774
    %v811 = vunpack.c.l.b16 %v775
    %v812 = vunpack.c.l.b16 %v776
    %v813 = vunpack.c.l.b16 %v777
    %v814 = vunpack.c.l.b16 %v778
    %v815 = vunpack.c.l.b16 %v779
    %v816 = vpack.c.b16 %v801, %v800
    %v817 = vpack.c.b16 %v803, %v802
    %v818 = vpack.c.b16 %v805, %v804
    %v819 = vpack.c.b16 %v807, %v806
    %v820 = vpack.c.b16 %v809, %v808
    %v821 = vpack.c.b16 %v811, %v810
    %v822 = vpack.c.b16 %v813, %v812
    %v823 = vpack.c.b16 %v815, %v814
    %832 = vmatprep.subr.bf16.mxu0 0
    %833 = vmatpush1.bf16.msra.mxu0 %v816
    %834 = vmatprep.subr.bf16.mxu0 0
    %835 = vmatpush1.bf16.msra.mxu0 %v817
    %836 = vmatprep.subr.bf16.mxu0 0
    %837 = vmatpush1.bf16.msra.mxu0 %v818
    %838 = vmatprep.subr.bf16.mxu0 0
    %839 = vmatpush1.bf16.msra.mxu0 %v819
    %840 = vmatprep.subr.bf16.mxu0 0
    %841 = vmatpush1.bf16.msra.mxu0 %v820
    %842 = vmatprep.subr.bf16.mxu0 0
    %843 = vmatpush1.bf16.msra.mxu0 %v821
    %844 = vmatprep.subr.bf16.mxu0 0
    %845 = vmatpush1.bf16.msra.mxu0 %v822
    %846 = vmatprep.subr.bf16.mxu0 0
    %847 = vmatpush1.bf16.msra.mxu0 %v823
    %848 = vmatprep.subr.bf16.mxu0 0
    %849 = vmatpush1.bf16.msra.mxu0 0
    %850 = vmatprep.subr.bf16.mxu0 0
    %851 = vmatpush1.bf16.msra.mxu0 0
    %852 = vmatprep.subr.bf16.mxu0 0
    %853 = vmatpush1.bf16.msra.mxu0 0
    %854 = vmatprep.subr.bf16.mxu0 0
    %855 = vmatpush1.bf16.msra.mxu0 0
    %856 = vmatprep.subr.bf16.mxu0 0
    %857 = vmatpush1.bf16.msra.mxu0 0
    %858 = vmatprep.subr.bf16.mxu0 0
    %859 = vmatpush1.bf16.msra.mxu0 0
    %860 = vmatprep.subr.bf16.mxu0 0
    %861 = vmatpush1.bf16.msra.mxu0 0
    %862 = vmatprep.subr.bf16.mxu0 0
    %863 = vmatpush1.bf16.msra.mxu0 0
    %864 = vmatprep.mubr.bf16.mxu0 0
    %865 = vmatmul.mubr.bf16.gmra.mrb[0].mxu0 %v763
    %v866 = vpop.f32.mrb[0].mxu0
    %v867 = vadd.f32 %v783, %v866
    %v868 = vpop.f32.mrb[0].mxu0
    %v869 = vpop.f32.mrb[0].mxu0
    %v870 = vpop.f32.mrb[0].mxu0
    %871 = vdwg.mxu0
    %872 = vst [vmem:[#allocation10] sm:$0xff] %v867
    // Predicated region
    $region38: #{mlp_forward.1} parent=1 // pred_check
      _
    $region39: #{mlp_forward.1} parent=1 // pred_check_branch
      %874 = sbr.rel (0) target = $region41
    $region40: #{mlp_forward.1} parent=1 // pred_region
      %s876 = ssub.s32 128, 128
      %877 = vsyncadd [#allocation4], %s876
      %s879 = sshll.u32 [#allocation10], 4
      %s880 = int_to_ptr.vmem [resolvable:$true] %s879
      %882 = dma.vmem_to_hbm [thread:$0]  %s880, 128, %s5, [#allocation4]
    $region41: #{mlp_forward.1} parent=1 // pred_fallthru
      _
    // Predicated region
    $region42: #{mlp_forward.1} parent=1 // pred_check
      _
    $region43: #{mlp_forward.1} parent=1 // pred_check_branch
      %884 = sbr.rel (0) target = $region45
    $region44: #{mlp_forward.1} parent=1 // pred_region
      %885 = dma.done [#allocation4], 128
    $region45: #{mlp_forward.1} parent=1 // pred_fallthru
      _
    %886 = vsyncpa [#allocation3], 1
    %887 = vsyncpa [#allocation6], 1
    %888 = vsyncpa [#allocation9], 1
    %889 = vsyncpa [#allocation4], 1

</llo_original>
